<compile_context>
chip_gen: v5e
topology: v5e:2x2
jax: 0.10.0
libtpu: 0.0.40
codegen_flags: <defaults>
</compile_context>

<pallas_src>
import jax
import jax.numpy as jnp
from jax import lax
from jax.experimental import pallas as pl
from jax.experimental.pallas import tpu as pltpu

GAMMA = 2.0          # specialized below as an explicit square (d * d)
IGNORE_INDEX = -100
_MIB = 1024 * 1024


def _round_up(x, m):
    return ((x + m - 1) // m) * m


def _tpu_generation_budgets():
    """(block_budget_bytes, vmem_limit_bytes) tuned per TPU generation."""
    cap = None
    try:
        cap = pltpu.get_tpu_info().vmem_capacity_bytes
    except Exception:
        cap = None
    kind = ""
    try:
        kind = jax.devices()[0].device_kind.lower()
    except Exception:
        pass

    if cap is not None and cap <= 80 * _MIB:
        # v7x: 64 MiB per TensorCore, 3.2 TB/s HBM -> bigger-than-default
        # blocks but with real headroom; explicit limit above the 32 MiB
        # default scoped window.
        return 24 * _MIB, 44 * _MIB
    if "v5" in kind:
        # v5e: 16 MiB default scoped VMEM and no bf16 VPU path, so the f32
        # upcast temporaries eat the budget fastest; keep blocks modest but
        # raise the scoped limit explicitly.
        return 10 * _MIB, 28 * _MIB
    # v6e (and other 128 MiB parts): plenty of VMEM on a 1.4 TB/s part.
    return 36 * _MIB, 72 * _MIB


def _pick_tile_n(n, c, itemsize, block_budget_bytes):
    """Rows per grid step, sized by BYTES of VMEM the block actually costs."""
    c_lanes = _round_up(c, 128)            # VMEM stores (8,128) tiles
    # double-buffered input block (native dtype) + ~5 full-width f32
    # temporaries generated inside the kernel body.
    per_row = c_lanes * (2 * itemsize + 5 * 4)
    tile = max(8, block_budget_bytes // per_row)
    tile = (tile // 8) * 8
    # megacore (v7x): keep >= 4 grid steps so both TensorCores get work;
    # no-op on single-TC v5e/v6e and for tiny N.
    tile = min(tile, max(8, _round_up(pl.cdiv(n, 4), 8)))
    # never bigger than the (8-padded) row count
    tile = min(tile, _round_up(n, 8))
    return max(8, tile)


def focal_loss_kernel(x_ref, t_ref, out_ref):
    # x_ref: [TILE_N, C] logits, t_ref: [TILE_N, 1] int32, out_ref: [1, 1, 128]
    x = x_ref[...].astype(jnp.float32)                      # [TN, C]
    t = t_ref[...]                                          # [TN, 1] int32
    valid = t != IGNORE_INDEX                               # [TN, 1] bool

    # row-wise logsumexp (numerically stable); only exp needed over the tile
    m = jnp.max(x, axis=1, keepdims=True)                   # [TN, 1]
    z = x - m
    lse = jnp.log(jnp.sum(jnp.exp(z), axis=1, keepdims=True))

    # gather z at the target class via a select-sum (no int->f32 cast, no
    # full-tile multiply, no f32 one-hot temporary).
    col = lax.broadcasted_iota(jnp.int32, x.shape, 1)       # [TN, C]
    picked_z = jnp.sum(jnp.where(col == t, z, 0.0),
                       axis=1, keepdims=True)               # z[i, target_i]
    picked_lp = picked_z - lse                              # log_pt[i, target_i]

    # focal modulation, gamma = 2 -> explicit square (no float-exponent pow),
    # computed only on the gathered [TN, 1] values.
    picked_pt = jnp.exp(picked_lp)                          # [TN, 1]
    d = 1.0 - picked_pt
    term = d * d * picked_lp                                # [TN, 1]

    # nll_loss pieces with ignore_index (weight=None).  where-selects (not
    # multiplies) so garbage rows in the ragged last block cannot NaN-poison
    # the reduction.
    loss_sum = -jnp.sum(jnp.where(valid, term, 0.0))
    count = jnp.sum(jnp.where(valid, 1.0, 0.0))

    # lane-dense partial output: lane 0 = loss_sum, lane 1 = count
    lane = lax.broadcasted_iota(jnp.int32, (1, 1, 128), 2)
    out_ref[...] = jnp.where(lane == 0, loss_sum,
                             jnp.where(lane == 1, count, 0.0))


def focal_loss(logits, target):
    """logits: [N, C] float, target: [N] int -> scalar f32 loss."""
    N, C = logits.shape
    itemsize = jnp.dtype(logits.dtype).itemsize

    block_budget, vmem_limit = _tpu_generation_budgets()
    tile_n = _pick_tile_n(N, C, itemsize, block_budget)
    num_tiles = pl.cdiv(N, tile_n)
    n_pad = num_tiles * tile_n

    # Only the tiny target vector is padded; the [N, C] logits are consumed
    # unpadded (the ragged last block is masked via IGNORE_INDEX targets).
    t = target.astype(jnp.int32)
    if n_pad != N:
        t = jnp.pad(t, (0, n_pad - N), constant_values=IGNORE_INDEX)
    t2d = t.reshape(n_pad, 1)

    cost = pl.CostEstimate(
        flops=6 * N * C,
        transcendentals=N * C,
        bytes_accessed=N * C * itemsize + n_pad * 4 + num_tiles * 128 * 4,
    )

    # TODO(synk): for vocab-sized C (32k+), add a second grid axis over C with
    # an online logsumexp + online gather so blocks stay within v7x's 64 MiB
    # per-TC VMEM; here C is kept as one block.
    partials = pl.pallas_call(
        focal_loss_kernel,
        out_shape=jax.ShapeDtypeStruct((num_tiles, 1, 128), jnp.float32),
        grid=(num_tiles,),
        in_specs=[
            pl.BlockSpec((tile_n, C), lambda i: (i, 0)),
            pl.BlockSpec((tile_n, 1), lambda i: (i, 0)),
        ],
        out_specs=pl.BlockSpec((1, 1, 128), lambda i: (i, 0, 0)),
        compiler_params=pltpu.CompilerParams(
            dimension_semantics=("parallel",),
            vmem_limit_bytes=vmem_limit),
        cost_estimate=cost,
    )(logits, t2d)

    sums = jnp.sum(partials, axis=(0, 1))  # [128]: lane0=loss_sum, lane1=count
    # NB: count==0 (all targets ignored) yields NaN, matching PyTorch 'mean'.
    return sums[0] / sums[1]


def focal_loss_ref(logits, target):
    """Pure-JAX reference for verification."""
    x = logits.astype(jnp.float32)
    log_pt = jax.nn.log_softmax(x, axis=1)
    pt = jnp.exp(log_pt)
    mod = (1.0 - pt) ** GAMMA * log_pt
    picked = jnp.take_along_axis(
        mod, jnp.clip(target, 0, x.shape[1] - 1)[:, None], axis=1
    )[:, 0]
    valid = (target != IGNORE_INDEX).astype(jnp.float32)
    return -jnp.sum(picked * valid) / jnp.sum(valid)


if __name__ == "__main__":
    key = jax.random.PRNGKey(0)

    # small shape matching the module spec: [N, C] logits, [N] targets
    N, C = 8, 32
    k1, k2 = jax.random.split(key)
    logits = jax.random.normal(k1, (N, C), dtype=jnp.float32)
    target = jax.random.randint(k2, (N,), 0, C, dtype=jnp.int32)
    target = target.at[3].set(IGNORE_INDEX)   # exercise ignore_index masking

    loss = focal_loss(logits, target)
    jax.block_until_ready(loss)
    ref = focal_loss_ref(logits, target)
    assert jnp.allclose(loss, ref, rtol=1e-5, atol=1e-5), (loss, ref)

    # second case exercises the multi-tile grid + ragged-last-block mask path
    k3, k4 = jax.random.split(k2)
    N2 = 1029
    logits2 = jax.random.normal(k3, (N2, C), dtype=jnp.float32)
    target2 = jax.random.randint(k4, (N2,), 0, C, dtype=jnp.int32)
    target2 = target2.at[::7].set(IGNORE_INDEX)
    loss2 = focal_loss(logits2, target2)
    jax.block_until_ready(loss2)
    ref2 = focal_loss_ref(logits2, target2)
    assert jnp.allclose(loss2, ref2, rtol=1e-5, atol=1e-5), (loss2, ref2)

    print("KERNEL_OK")
</pallas_src>

<mosaic_0001>
module attributes {stable_mosaic.version = 11 : i64} {
  func.func @focal_loss_kernel(%arg0: i32, %arg1: memref<8x32xf32, #tpu.memory_space<vmem>>, %arg2: memref<8x1xi32, #tpu.memory_space<vmem>>, %arg3: memref<1x1x128xf32, #tpu.memory_space<vmem>>) attributes {dimension_semantics = [#tpu.dimension_semantics<parallel>], iteration_bounds = array<i64: 1>, scalar_prefetch = 0 : i64, scratch_operands = 0 : i64, tpu.core_type = #tpu.core_type<tc>, window_params = [{transform_indices = @transform_0, window_bounds = array<i64: 8, 32>}, {transform_indices = @transform_1, window_bounds = array<i64: 8, 1>}, {transform_indices = @transform_2, window_bounds = array<i64: 1, 1, 128>}]} {
    %c0 = arith.constant 0 : index
    %c0_0 = arith.constant 0 : index
    %0 = vector.load %arg1[%c0, %c0_0] : memref<8x32xf32, #tpu.memory_space<vmem>>, vector<8x32xf32>
    %c0_1 = arith.constant 0 : index
    %c0_2 = arith.constant 0 : index
    %1 = vector.load %arg2[%c0_1, %c0_2] : memref<8x1xi32, #tpu.memory_space<vmem>>, vector<8x1xi32>
    %c-100_i32 = arith.constant -100 : i32
    %2 = vector.broadcast %c-100_i32 : i32 to vector<8x1xi32>
    %3 = arith.cmpi ne, %1, %2 : vector<8x1xi32>
    %cst = arith.constant dense<0xFF800000> : vector<8xf32>
    %4 = vector.multi_reduction <maximumf>, %0, %cst [1] : vector<8x32xf32> to vector<8xf32>
    %5 = vector.shape_cast %4 : vector<8xf32> to vector<8x1xf32>
    %6 = vector.broadcast %5 : vector<8x1xf32> to vector<8x32xf32>
    %7 = arith.subf %0, %6 : vector<8x32xf32>
    %8 = math.exp %7 : vector<8x32xf32>
    %cst_3 = arith.constant dense<0.000000e+00> : vector<8xf32>
    %9 = vector.multi_reduction <add>, %8, %cst_3 [1] : vector<8x32xf32> to vector<8xf32>
    %10 = vector.shape_cast %9 : vector<8xf32> to vector<8x1xf32>
    %11 = math.log %10 : vector<8x1xf32>
    %12 = tpu.iota {dimensions = array<i32: 1>} : vector<8x32xi32>
    %13 = vector.broadcast %1 : vector<8x1xi32> to vector<8x32xi32>
    %14 = arith.cmpi eq, %12, %13 : vector<8x32xi32>
    %cst_4 = arith.constant 0.000000e+00 : f32
    %15 = vector.broadcast %cst_4 : f32 to vector<8x32xf32>
    %16 = arith.select %14, %7, %15 : vector<8x32xi1>, vector<8x32xf32>
    %cst_5 = arith.constant dense<0.000000e+00> : vector<8xf32>
    %17 = vector.multi_reduction <add>, %16, %cst_5 [1] : vector<8x32xf32> to vector<8xf32>
    %18 = vector.shape_cast %17 : vector<8xf32> to vector<8x1xf32>
    %19 = arith.subf %18, %11 : vector<8x1xf32>
    %20 = math.exp %19 : vector<8x1xf32>
    %cst_6 = arith.constant 1.000000e+00 : f32
    %21 = vector.broadcast %cst_6 : f32 to vector<8x1xf32>
    %22 = arith.subf %21, %20 : vector<8x1xf32>
    %23 = arith.mulf %22, %22 : vector<8x1xf32>
    %24 = arith.mulf %23, %19 : vector<8x1xf32>
    %cst_7 = arith.constant 0.000000e+00 : f32
    %25 = vector.broadcast %cst_7 : f32 to vector<8x1xf32>
    %26 = arith.select %3, %24, %25 : vector<8x1xi1>, vector<8x1xf32>
    %27 = vector.shape_cast %26 : vector<8x1xf32> to vector<1x8x1xf32>
    %cst_8 = arith.constant dense<0.000000e+00> : vector<1xf32>
    %28 = vector.multi_reduction <add>, %27, %cst_8 [1, 2] : vector<1x8x1xf32> to vector<1xf32>
    %29 = vector.shape_cast %28 : vector<1xf32> to vector<1x1x1xf32>
    %30 = vector.extract %29[0, 0, 0] : f32 from vector<1x1x1xf32>
    %cst_9 = arith.constant 0.000000e+00 : f32
    %31 = arith.subf %cst_9, %30 : f32
    %cst_10 = arith.constant 1.000000e+00 : f32
    %cst_11 = arith.constant 0.000000e+00 : f32
    %32 = vector.broadcast %cst_10 : f32 to vector<8x1xf32>
    %33 = vector.broadcast %cst_11 : f32 to vector<8x1xf32>
    %34 = arith.select %3, %32, %33 : vector<8x1xi1>, vector<8x1xf32>
    %35 = vector.shape_cast %34 : vector<8x1xf32> to vector<1x8x1xf32>
    %cst_12 = arith.constant dense<0.000000e+00> : vector<1xf32>
    %36 = vector.multi_reduction <add>, %35, %cst_12 [1, 2] : vector<1x8x1xf32> to vector<1xf32>
    %37 = vector.shape_cast %36 : vector<1xf32> to vector<1x1x1xf32>
    %38 = vector.extract %37[0, 0, 0] : f32 from vector<1x1x1xf32>
    %39 = tpu.iota {dimensions = array<i32: 2>} : vector<1x1x128xi32>
    %c0_i32 = arith.constant 0 : i32
    %40 = vector.broadcast %c0_i32 : i32 to vector<1x1x128xi32>
    %41 = arith.cmpi eq, %39, %40 : vector<1x1x128xi32>
    %c1_i32 = arith.constant 1 : i32
    %42 = vector.broadcast %c1_i32 : i32 to vector<1x1x128xi32>
    %43 = arith.cmpi eq, %39, %42 : vector<1x1x128xi32>
    %cst_13 = arith.constant 0.000000e+00 : f32
    %44 = vector.broadcast %38 : f32 to vector<1x1x128xf32>
    %45 = vector.broadcast %cst_13 : f32 to vector<1x1x128xf32>
    %46 = arith.select %43, %44, %45 : vector<1x1x128xi1>, vector<1x1x128xf32>
    %47 = vector.broadcast %31 : f32 to vector<1x1x128xf32>
    %48 = arith.select %41, %47, %46 : vector<1x1x128xi1>, vector<1x1x128xf32>
    %c0_14 = arith.constant 0 : index
    %c0_15 = arith.constant 0 : index
    %c0_16 = arith.constant 0 : index
    %49 = vector.load %arg3[%c0_14, %c0_15, %c0_16] : memref<1x1x128xf32, #tpu.memory_space<vmem>>, vector<1x1x128xf32>
    tpu.vector_store %arg3[%c0_14, %c0_15, %c0_16], %48 {strides = array<i32>} : memref<1x1x128xf32, #tpu.memory_space<vmem>>, vector<1x1x128xf32>,
    return
  }
  func.func @transform_0(%arg0: i32) -> (i32, i32) {
    %c0_i32 = arith.constant 0 : i32
    %c0_i32_0 = arith.constant 0 : i32
    return %arg0, %c0_i32 : i32, i32
  }
  func.func @transform_1(%arg0: i32) -> (i32, i32) {
    %c0_i32 = arith.constant 0 : i32
    %c0_i32_0 = arith.constant 0 : i32
    return %arg0, %c0_i32 : i32, i32
  }
  func.func @transform_2(%arg0: i32) -> (i32, i32, i32) {
    %c0_i32 = arith.constant 0 : i32
    %c0_i32_0 = arith.constant 0 : i32
    %c0_i32_1 = arith.constant 0 : i32
    return %arg0, %c0_i32, %c0_i32_0 : i32, i32, i32
  }
}

</mosaic_0001>

<llo_original>
// kernel: tpu_custom_call.1
$region0: #{tpu_custom_call.1}
  #allocation0 [shape = 'u32[]', space=smem, size = 0x4, offset = 0x4, fixed_abs, tag = 'smem constant byte address 0x4 - core index']
  #allocation1 [shape = 'u32[72,128]{1,0:T(1,128)}', space=vmem, size = 0x9000, scoped, tag = 'internal scratch']
  %s0 = inlined_call_operand.vmem [shape: f32[8,32], index: 0, kind: input, shape index: {}]
  %s1 = inlined_call_operand.vmem [shape: s32[8,1], index: 1, kind: input, shape index: {}]
  %s2 = inlined_call_operand.hbm [shape: f32[1,1,128], index: 2, kind: output, shape index: {}]
  %s3 = sld [smem:[#allocation0]]
  $region18: #{tpu_custom_call.1} parent=0
    _
  %s5 = ssub.s32 1, %s3
  %s6 = scalar_select 0, %s5, %s3
  $region1: #{tpu_custom_call.1} parent=0
    #allocation2 [shape = 'u8[512]{0}', space=vmem, size = 0x400, scoped, tag = 'output window, operand 0, single buffered']
    #allocation3 [shape = 's32[1]{0}', space=sflag, size = 0x4, scoped, tag = 'scoped memory for tpu_custom_call.1']
    %7 = vsyncpa [#allocation3], 0
    // Predicated region
    $region2: #{tpu_custom_call.1} parent=1 // pred_check
      _
    $region3: #{tpu_custom_call.1} parent=1 // pred_check_branch
      %9 = sbr.rel (0) target = $region5
    $region4: #{tpu_custom_call.1} parent=1 // pred_region
      _
    $region5: #{tpu_custom_call.1} parent=1 // pred_fallthru
      _
    // Predicated region
    $region6: #{tpu_custom_call.1} parent=1 // pred_check
      _
    $region7: #{tpu_custom_call.1} parent=1 // pred_check_branch
      %11 = sbr.rel (0) target = $region9
    $region8: #{tpu_custom_call.1} parent=1 // pred_region
      _
    $region9: #{tpu_custom_call.1} parent=1 // pred_fallthru
      _
    %v12 = vld [vmem:[%s0] sm:$0xff]
    %v13 = vld [vmem:[%s1] sm:$0xff]
    %vm14 = vcmp.ne.s32.totalorder %v13, 4294967196
    %vm15 = vcmask 261120
    %v16 = vsel %vm15, %v12, -inf
    %17 = vmax.xlane.f32.xlu0 %v16
    %v18 = vpop.xlane.xlu0 %17
    %v19 = vsub.f32 %v12, %v18
    %v20 = vmul.f32 %v19, 1.442695
    %v21 = vpow.pop %v20
    %v22 = vsel %vm15, %v21, 0.0
    %23 = vadd.xlane.f32.xlu0 %v22
    %v24 = vpop.xlane.xlu0 %23
    %v25 = vlog2.pop %v24
    %v26 = vmul.f32 %v25, 0.6931472
    %v27 = vlaneseq
    %v28 = vand.u32 %v27, 127
    %29 = vset.pattern.permute.xlu0 0
    %30 = vperm.xlu0 %29, %v13
    %v31 = vpop.permute.xlu0 %30
    %vm32 = vcmp.eq.s32.totalorder %v28, %v31
    %v33 = vsel %vm32, %v19, 0.0
    %v34 = vsel %vm15, %v33, 0.0
    %35 = vadd.xlane.f32.xlu0 %v34
    %v36 = vpop.xlane.xlu0 %35
    %v37 = vsub.f32 %v36, %v26
    %v38 = vmul.f32 %v37, 1.442695
    %v39 = vpow.pop %v38
    %v40 = vsub.f32 1.0, %v39
    %v41 = vmul.f32 %v40, %v40
    %v42 = vmul.f32 %v41, %v37
    %v43 = vsel %vm14, %v42, 0.0
    %vm44 = vcmask 7168
    %v45 = vsel %vm44, %v43, 0.0
    %46 = vadd.xlane.f32.xlu0 %v45
    %v47 = vpop.xlane.xlu0 %46
    %v48 = vrot.slane %v47, 4
    %v49 = vadd.f32 %v47, %v48
    %v50 = vrot.slane %v49, 2
    %v51 = vadd.f32 %v49, %v50
    %v52 = vrot.slane %v51, 1
    %v53 = vadd.f32 %v51, %v52
    %s54 = vtos %v53
    %s55 = ssub.f32 0.0, %s54
    %v56 = vsel %vm14, 1.0, 0.0
    %v57 = vsel %vm44, %v56, 0.0
    %58 = vadd.xlane.f32.xlu0 %v57
    %v59 = vpop.xlane.xlu0 %58
    %v60 = vrot.slane %v59, 4
    %v61 = vadd.f32 %v59, %v60
    %v62 = vrot.slane %v61, 2
    %v63 = vadd.f32 %v61, %v62
    %v64 = vrot.slane %v63, 1
    %v65 = vadd.f32 %v63, %v64
    %s66 = vtos %v65
    %vm67 = vcmp.eq.s32.totalorder %v28, 0
    %vm68 = vcmp.eq.s32.totalorder %v28, 1
    %v69 = vstv %s66
    %v70 = vsel %vm68, %v69, 0.0
    %v71 = vstv %s55
    %v72 = vsel %vm67, %v71, %v70
    %73 = vst [vmem:[#allocation2] sm:$0x1] %v72
    // Predicated region
    $region10: #{tpu_custom_call.1} parent=1 // pred_check
      _
    $region11: #{tpu_custom_call.1} parent=1 // pred_check_branch
      %75 = sbr.rel (0) target = $region13
    $region12: #{tpu_custom_call.1} parent=1 // pred_region
      %77 = vsyncadd [#allocation3], 0
      %s79 = sshll.u32 [#allocation2], 4
      %s80 = int_to_ptr.vmem [resolvable:$true] %s79
      %s81 = sshll.u32 %s2, 4
      %s82 = int_to_ptr.hbm [resolvable:$true] %s81
      %84 = dma.vmem_to_hbm [thread:$0]  %s80, 16, %s82, [#allocation3]
    $region13: #{tpu_custom_call.1} parent=1 // pred_fallthru
      _
    // Predicated region
    $region14: #{tpu_custom_call.1} parent=1 // pred_check
      _
    $region15: #{tpu_custom_call.1} parent=1 // pred_check_branch
      %86 = sbr.rel (0) target = $region17
    $region16: #{tpu_custom_call.1} parent=1 // pred_region
      %88 = dma.done [#allocation3], 16
    $region17: #{tpu_custom_call.1} parent=1 // pred_fallthru
      _
    %89 = vsyncpa [#allocation3], 1

</llo_original>
